<compile_context>
chip_gen: v7x
topology: tpu7x:2x2x1
jax: 0.10.0
libtpu: 0.0.40
codegen_flags: <defaults>
</compile_context>

<pallas_src>
import numpy as np
import jax
import jax.numpy as jnp
from jax.experimental import pallas as pl
from jax.experimental.pallas import tpu as pltpu

EPS = 0.003
H1 = 128   # fcs1 output width
H2 = 64    # fcs2 / fca1 / fc2 output width


def critic_kernel(x_ref, w_in_ref, b_in_ref, w2_ref, b2_ref,
                  wf2s_ref, wf2a_ref, bf2_ref, wf3_ref, bf3_ref, o_ref):
    """Feature-major layout: batch on the lane axis.

    x_ref    : [din, TM]      bf16  din = state_dim + action_dim (batch = lanes)
    w_in_ref : [192, din]     bf16  block-diag [[fcs1.W, 0], [0, fca1.W]]
    b_in_ref : [192, 1]       f32   concat(fcs1.b, fca1.b) as a column
    w2_ref   : [64, 128]      bf16  fcs2.W
    wf2s/wf2a: [64, 64]       bf16  fc2.W split into s2-half / a1-half
    wf3_ref  : [64, 1]        f32   fc3.W as a column (VPU/XLU epilogue)
    bf3_ref  : [1]            f32   SMEM scalar
    o_ref    : [1, TM]        f32   Q^T (lane-dense row)
    """
    f32 = jnp.float32
    bf16 = jnp.bfloat16

    # Fused input layer: one matmul produces both relu(fcs1(s)) and relu(fca1(a)).
    y = jnp.dot(w_in_ref[...], x_ref[...], preferred_element_type=f32)
    y = jnp.maximum(y + b_in_ref[...], 0.0)            # [192, TM] f32
    s1 = y[:H1, :].astype(bf16)                        # relu(fcs1(state))^T  [128, TM]
    a1 = y[H1:, :].astype(bf16)                        # relu(fca1(action))^T [64, TM]

    # s2 = relu(fcs2(s1))
    s2 = jnp.maximum(
        jnp.dot(w2_ref[...], s1, preferred_element_type=f32) + b2_ref[...],
        0.0).astype(bf16)                              # [64, TM]

    # x = relu(fc2(concat(s2, a1))) == relu(Wf2s@s2 + Wf2a@a1 + b)
    h = jnp.maximum(
        jnp.dot(wf2s_ref[...], s2, preferred_element_type=f32)
        + jnp.dot(wf2a_ref[...], a1, preferred_element_type=f32)
        + bf2_ref[...],
        0.0)                                           # [64, TM] f32

    # fc3 epilogue: VPU multiply + XLU sublane-reduce, lane-dense [1, TM] store.
    q = jnp.sum(h * wf3_ref[...], axis=0, keepdims=True) + bf3_ref[0]
    o_ref[...] = q


def critic_forward(state, action, params, *, tm=256):
    """Q(s, a): state [n, state_dim], action [n, action_dim] -> [n, 1] f32."""
    n, state_dim = state.shape
    action_dim = action.shape[1]
    din = state_dim + action_dim
    n_pad = ((n + tm - 1) // tm) * tm
    grid = (n_pad // tm,)

    # Batch goes onto the lane axis: concat + zero-pad + transpose in the wrapper.
    x = jnp.concatenate([state, action], axis=1)
    if n_pad != n:
        x = jnp.pad(x, ((0, n_pad - n), (0, 0)))
    x = x.T.astype(jnp.bfloat16)                       # [din, n_pad]

    def full(shape):
        return pl.BlockSpec(shape, lambda i: (0, 0))   # grid-invariant, VMEM-resident

    flops = 2 * n_pad * ((H1 + H2) * din + H2 * H1 + 2 * H2 * H2 + H2)
    w_bytes = sum(int(np.prod(params[k].shape)) * params[k].dtype.itemsize
                  for k in ("w_in", "b_in", "w2", "b2", "wf2s", "wf2a",
                            "bf2", "wf3", "bf3"))
    bytes_accessed = int(x.size * x.dtype.itemsize + w_bytes + n_pad * 4)

    q_t = pl.pallas_call(
        critic_kernel,
        out_shape=jax.ShapeDtypeStruct((1, n_pad), jnp.float32),
        grid_spec=pltpu.PrefetchScalarGridSpec(
            num_scalar_prefetch=0,
            grid=grid,
            in_specs=[
                pl.BlockSpec((din, tm), lambda i: (0, i)),          # x tile (pipelined)
                full((H1 + H2, din)),                               # w_in
                full((H1 + H2, 1)),                                 # b_in
                full((H2, H1)),                                     # w2
                full((H2, 1)),                                      # b2
                full((H2, H2)),                                     # wf2s
                full((H2, H2)),                                     # wf2a
                full((H2, 1)),                                      # bf2
                full((H2, 1)),                                      # wf3 (column, f32)
                pl.BlockSpec(memory_space=pltpu.MemorySpace.SMEM),  # bf3 scalar
            ],
            out_specs=pl.BlockSpec((1, tm), lambda i: (0, i)),
        ),
        compiler_params=pltpu.CompilerParams(
            dimension_semantics=("parallel",)),
        cost_estimate=pl.CostEstimate(flops=int(flops), transcendentals=0,
                                      bytes_accessed=bytes_accessed),
    )(x, params["w_in"], params["b_in"], params["w2"], params["b2"],
      params["wf2s"], params["wf2a"], params["bf2"], params["wf3"],
      params["bf3"])
    return q_t[0, :n].reshape(n, 1)


def init_params(key, state_dim, action_dim):
    """Mirrors the PyTorch Critic init (fanin_init uses weight.size()[0] as fanin,
    fc3.weight ~ U(-EPS, EPS), biases use the nn.Linear default range)."""
    ks = jax.random.split(key, 10)
    f32, bf16 = jnp.float32, jnp.bfloat16

    def uniform(k, shape, v):
        return jax.random.uniform(k, shape, f32, -v, v)

    # fcs1: Linear(state_dim, 128)
    w1 = uniform(ks[0], (H1, state_dim), 1.0 / np.sqrt(H1))
    b1 = uniform(ks[1], (H1, 1), 1.0 / np.sqrt(state_dim))
    # fcs2: Linear(128, 64)
    w2 = uniform(ks[2], (H2, H1), 1.0 / np.sqrt(H2))
    b2 = uniform(ks[3], (H2, 1), 1.0 / np.sqrt(H1))
    # fca1: Linear(action_dim, 64)
    wa = uniform(ks[4], (H2, action_dim), 1.0 / np.sqrt(H2))
    ba = uniform(ks[5], (H2, 1), 1.0 / np.sqrt(action_dim))
    # fc2: Linear(128, 64)
    wf2 = uniform(ks[6], (H2, H1), 1.0 / np.sqrt(H2))
    bf2 = uniform(ks[7], (H2, 1), 1.0 / np.sqrt(H1))
    # fc3: Linear(64, 1)
    wf3 = uniform(ks[8], (H2, 1), EPS)              # stored as a column, f32
    bf3 = uniform(ks[9], (1,), 1.0 / np.sqrt(H2))

    # Block-diagonal fusion of fcs1 / fca1 for a single input-layer matmul.
    w_in = jnp.zeros((H1 + H2, state_dim + action_dim), f32)
    w_in = w_in.at[:H1, :state_dim].set(w1).at[H1:, state_dim:].set(wa)
    b_in = jnp.concatenate([b1, ba], axis=0)

    return dict(
        w_in=w_in.astype(bf16), b_in=b_in,
        w2=w2.astype(bf16), b2=b2,
        wf2s=wf2[:, :H2].astype(bf16), wf2a=wf2[:, H2:].astype(bf16), bf2=bf2,
        wf3=wf3, bf3=bf3,
    )


def critic_ref(state, action, p, state_dim):
    """Pure-JAX batch-major reference with the same bf16-weight / f32-accumulate scheme."""
    f32, bf16 = jnp.float32, jnp.bfloat16
    w1 = p["w_in"][:H1, :state_dim]
    wa = p["w_in"][H1:, state_dim:]
    b1 = p["b_in"][:H1, 0]
    ba = p["b_in"][H1:, 0]
    s = state.astype(bf16)
    a = action.astype(bf16)
    s1 = jnp.maximum(jnp.dot(s, w1.T, preferred_element_type=f32) + b1, 0.0)
    s2 = jnp.maximum(jnp.dot(s1.astype(bf16), p["w2"].T,
                             preferred_element_type=f32) + p["b2"][:, 0], 0.0)
    a1 = jnp.maximum(jnp.dot(a, wa.T, preferred_element_type=f32) + ba, 0.0)
    h = jnp.maximum(
        jnp.dot(s2.astype(bf16), p["wf2s"].T, preferred_element_type=f32)
        + jnp.dot(a1.astype(bf16), p["wf2a"].T, preferred_element_type=f32)
        + p["bf2"][:, 0], 0.0)
    return jnp.dot(h, p["wf3"], preferred_element_type=f32) + p["bf3"][0]


if __name__ == "__main__":
    key = jax.random.PRNGKey(0)
    k_param, k_state, k_action = jax.random.split(key, 3)

    n, state_dim, action_dim = 8, 16, 8
    params = init_params(k_param, state_dim, action_dim)
    state = jax.random.normal(k_state, (n, state_dim), jnp.float32)
    action = jax.random.normal(k_action, (n, action_dim), jnp.float32)

    q = critic_forward(state, action, params)
    q = jax.block_until_ready(q)

    q_ref = critic_ref(state, action, params, state_dim)
    assert q.shape == (n, 1)
    np.testing.assert_allclose(np.asarray(q), np.asarray(q_ref),
                               rtol=2e-2, atol=2e-3)
    print("KERNEL_OK")
</pallas_src>

<mosaic_0001>
module attributes {stable_mosaic.version = 11 : i64} {
  func.func @critic_kernel(%arg0: i32, %arg1: memref<24x256xbf16, #tpu.memory_space<vmem>>, %arg2: memref<192x24xbf16, #tpu.memory_space<vmem>>, %arg3: memref<192x1xf32, #tpu.memory_space<vmem>>, %arg4: memref<64x128xbf16, #tpu.memory_space<vmem>>, %arg5: memref<64x1xf32, #tpu.memory_space<vmem>>, %arg6: memref<64x64xbf16, #tpu.memory_space<vmem>>, %arg7: memref<64x64xbf16, #tpu.memory_space<vmem>>, %arg8: memref<64x1xf32, #tpu.memory_space<vmem>>, %arg9: memref<64x1xf32, #tpu.memory_space<vmem>>, %arg10: memref<1xf32, #tpu.memory_space<smem>>, %arg11: memref<1x256xf32, #tpu.memory_space<vmem>>) attributes {dimension_semantics = [#tpu.dimension_semantics<parallel>], iteration_bounds = array<i64: 1>, scalar_prefetch = 0 : i64, scratch_operands = 0 : i64, tpu.core_type = #tpu.core_type<tc>, window_params = [{transform_indices = @transform_0, window_bounds = array<i64: 24, 256>}, {pipeline_mode = #tpu.pipeline_mode<synchronous>, transform_indices = @transform_1, window_bounds = array<i64: 192, 24>}, {pipeline_mode = #tpu.pipeline_mode<synchronous>, transform_indices = @transform_2, window_bounds = array<i64: 192, 1>}, {pipeline_mode = #tpu.pipeline_mode<synchronous>, transform_indices = @transform_3, window_bounds = array<i64: 64, 128>}, {pipeline_mode = #tpu.pipeline_mode<synchronous>, transform_indices = @transform_4, window_bounds = array<i64: 64, 1>}, {pipeline_mode = #tpu.pipeline_mode<synchronous>, transform_indices = @transform_5, window_bounds = array<i64: 64, 64>}, {pipeline_mode = #tpu.pipeline_mode<synchronous>, transform_indices = @transform_6, window_bounds = array<i64: 64, 64>}, {pipeline_mode = #tpu.pipeline_mode<synchronous>, transform_indices = @transform_7, window_bounds = array<i64: 64, 1>}, {pipeline_mode = #tpu.pipeline_mode<synchronous>, transform_indices = @transform_8, window_bounds = array<i64: 64, 1>}, {transform_indices = @transform_9, window_bounds = array<i64: 1>}, {transform_indices = @transform_10, window_bounds = array<i64: 1, 256>}]} {
    %c0 = arith.constant 0 : index
    %c0_0 = arith.constant 0 : index
    %0 = vector.load %arg2[%c0, %c0_0] : memref<192x24xbf16, #tpu.memory_space<vmem>>, vector<192x24xbf16>
    %c0_1 = arith.constant 0 : index
    %c0_2 = arith.constant 0 : index
    %1 = vector.load %arg1[%c0_1, %c0_2] : memref<24x256xbf16, #tpu.memory_space<vmem>>, vector<24x256xbf16>
    %cst = arith.constant dense<0.000000e+00> : vector<192x256xf32>
    %2 = tpu.matmul %0, %1, %cst {dimension_numbers = #tpu.dot_dimension_numbers<[1], [0], [0], [1], [0, 0, 1, 1], [], []>} : vector<192x24xbf16>, vector<24x256xbf16>, vector<192x256xf32> -> vector<192x256xf32>
    %c0_3 = arith.constant 0 : index
    %c0_4 = arith.constant 0 : index
    %3 = vector.load %arg3[%c0_3, %c0_4] : memref<192x1xf32, #tpu.memory_space<vmem>>, vector<192x1xf32>
    %4 = vector.broadcast %3 : vector<192x1xf32> to vector<192x256xf32>
    %5 = arith.addf %2, %4 : vector<192x256xf32>
    %cst_5 = arith.constant 0.000000e+00 : f32
    %6 = vector.broadcast %cst_5 : f32 to vector<192x256xf32>
    %7 = arith.maximumf %5, %6 : vector<192x256xf32>
    %8 = vector.extract_strided_slice %7 {offsets = [0, 0], sizes = [128, 256], strides = [1, 1]} : vector<192x256xf32> to vector<128x256xf32>
    %9 = arith.truncf %8 : vector<128x256xf32> to vector<128x256xbf16>
    %10 = vector.extract_strided_slice %7 {offsets = [128, 0], sizes = [64, 256], strides = [1, 1]} : vector<192x256xf32> to vector<64x256xf32>
    %11 = arith.truncf %10 : vector<64x256xf32> to vector<64x256xbf16>
    %c0_6 = arith.constant 0 : index
    %c0_7 = arith.constant 0 : index
    %12 = vector.load %arg4[%c0_6, %c0_7] : memref<64x128xbf16, #tpu.memory_space<vmem>>, vector<64x128xbf16>
    %cst_8 = arith.constant dense<0.000000e+00> : vector<64x256xf32>
    %13 = tpu.matmul %12, %9, %cst_8 {dimension_numbers = #tpu.dot_dimension_numbers<[1], [0], [0], [1], [0, 0, 1, 1], [], []>} : vector<64x128xbf16>, vector<128x256xbf16>, vector<64x256xf32> -> vector<64x256xf32>
    %c0_9 = arith.constant 0 : index
    %c0_10 = arith.constant 0 : index
    %14 = vector.load %arg5[%c0_9, %c0_10] : memref<64x1xf32, #tpu.memory_space<vmem>>, vector<64x1xf32>
    %15 = vector.broadcast %14 : vector<64x1xf32> to vector<64x256xf32>
    %16 = arith.addf %13, %15 : vector<64x256xf32>
    %cst_11 = arith.constant 0.000000e+00 : f32
    %17 = vector.broadcast %cst_11 : f32 to vector<64x256xf32>
    %18 = arith.maximumf %16, %17 : vector<64x256xf32>
    %19 = arith.truncf %18 : vector<64x256xf32> to vector<64x256xbf16>
    %c0_12 = arith.constant 0 : index
    %c0_13 = arith.constant 0 : index
    %20 = vector.load %arg6[%c0_12, %c0_13] : memref<64x64xbf16, #tpu.memory_space<vmem>>, vector<64x64xbf16>
    %cst_14 = arith.constant dense<0.000000e+00> : vector<64x256xf32>
    %21 = tpu.matmul %20, %19, %cst_14 {dimension_numbers = #tpu.dot_dimension_numbers<[1], [0], [0], [1], [0, 0, 1, 1], [], []>} : vector<64x64xbf16>, vector<64x256xbf16>, vector<64x256xf32> -> vector<64x256xf32>
    %c0_15 = arith.constant 0 : index
    %c0_16 = arith.constant 0 : index
    %22 = vector.load %arg7[%c0_15, %c0_16] : memref<64x64xbf16, #tpu.memory_space<vmem>>, vector<64x64xbf16>
    %cst_17 = arith.constant dense<0.000000e+00> : vector<64x256xf32>
    %23 = tpu.matmul %22, %11, %cst_17 {dimension_numbers = #tpu.dot_dimension_numbers<[1], [0], [0], [1], [0, 0, 1, 1], [], []>} : vector<64x64xbf16>, vector<64x256xbf16>, vector<64x256xf32> -> vector<64x256xf32>
    %24 = arith.addf %21, %23 : vector<64x256xf32>
    %c0_18 = arith.constant 0 : index
    %c0_19 = arith.constant 0 : index
    %25 = vector.load %arg8[%c0_18, %c0_19] : memref<64x1xf32, #tpu.memory_space<vmem>>, vector<64x1xf32>
    %26 = vector.broadcast %25 : vector<64x1xf32> to vector<64x256xf32>
    %27 = arith.addf %24, %26 : vector<64x256xf32>
    %cst_20 = arith.constant 0.000000e+00 : f32
    %28 = vector.broadcast %cst_20 : f32 to vector<64x256xf32>
    %29 = arith.maximumf %27, %28 : vector<64x256xf32>
    %c0_21 = arith.constant 0 : index
    %c0_22 = arith.constant 0 : index
    %30 = vector.load %arg9[%c0_21, %c0_22] : memref<64x1xf32, #tpu.memory_space<vmem>>, vector<64x1xf32>
    %31 = vector.broadcast %30 : vector<64x1xf32> to vector<64x256xf32>
    %32 = arith.mulf %29, %31 : vector<64x256xf32>
    %cst_23 = arith.constant dense<0.000000e+00> : vector<256xf32>
    %33 = vector.multi_reduction <add>, %32, %cst_23 [0] : vector<64x256xf32> to vector<256xf32>
    %34 = vector.shape_cast %33 : vector<256xf32> to vector<1x256xf32>
    %c0_24 = arith.constant 0 : index
    %35 = memref.load %arg10[%c0_24] : memref<1xf32, #tpu.memory_space<smem>>
    %36 = vector.broadcast %35 : f32 to vector<1x256xf32>
    %37 = arith.addf %34, %36 : vector<1x256xf32>
    %c0_25 = arith.constant 0 : index
    %c0_26 = arith.constant 0 : index
    %38 = vector.load %arg11[%c0_25, %c0_26] : memref<1x256xf32, #tpu.memory_space<vmem>>, vector<1x256xf32>
    tpu.vector_store %arg11[%c0_25, %c0_26], %37 {strides = array<i32>} : memref<1x256xf32, #tpu.memory_space<vmem>>, vector<1x256xf32>,
    return
  }
  func.func @transform_0(%arg0: i32) -> (i32, i32) {
    %c0_i32 = arith.constant 0 : i32
    %c0_i32_0 = arith.constant 0 : i32
    return %c0_i32, %arg0 : i32, i32
  }
  func.func @transform_1(%arg0: i32) -> (i32, i32) {
    %c0_i32 = arith.constant 0 : i32
    %c0_i32_0 = arith.constant 0 : i32
    %c0_i32_1 = arith.constant 0 : i32
    return %c0_i32, %c0_i32_0 : i32, i32
  }
  func.func @transform_2(%arg0: i32) -> (i32, i32) {
    %c0_i32 = arith.constant 0 : i32
    %c0_i32_0 = arith.constant 0 : i32
    %c0_i32_1 = arith.constant 0 : i32
    return %c0_i32, %c0_i32_0 : i32, i32
  }
  func.func @transform_3(%arg0: i32) -> (i32, i32) {
    %c0_i32 = arith.constant 0 : i32
    %c0_i32_0 = arith.constant 0 : i32
    %c0_i32_1 = arith.constant 0 : i32
    return %c0_i32, %c0_i32_0 : i32, i32
  }
  func.func @transform_4(%arg0: i32) -> (i32, i32) {
    %c0_i32 = arith.constant 0 : i32
    %c0_i32_0 = arith.constant 0 : i32
    %c0_i32_1 = arith.constant 0 : i32
    return %c0_i32, %c0_i32_0 : i32, i32
  }
  func.func @transform_5(%arg0: i32) -> (i32, i32) {
    %c0_i32 = arith.constant 0 : i32
    %c0_i32_0 = arith.constant 0 : i32
    %c0_i32_1 = arith.constant 0 : i32
    return %c0_i32, %c0_i32_0 : i32, i32
  }
  func.func @transform_6(%arg0: i32) -> (i32, i32) {
    %c0_i32 = arith.constant 0 : i32
    %c0_i32_0 = arith.constant 0 : i32
    %c0_i32_1 = arith.constant 0 : i32
    return %c0_i32, %c0_i32_0 : i32, i32
  }
  func.func @transform_7(%arg0: i32) -> (i32, i32) {
    %c0_i32 = arith.constant 0 : i32
    %c0_i32_0 = arith.constant 0 : i32
    %c0_i32_1 = arith.constant 0 : i32
    return %c0_i32, %c0_i32_0 : i32, i32
  }
  func.func @transform_8(%arg0: i32) -> (i32, i32) {
    %c0_i32 = arith.constant 0 : i32
    %c0_i32_0 = arith.constant 0 : i32
    %c0_i32_1 = arith.constant 0 : i32
    return %c0_i32, %c0_i32_0 : i32, i32
  }
  func.func @transform_9(%arg0: i32) -> i32 {
    %c0_i32 = arith.constant 0 : i32
    %c0_i32_0 = arith.constant 0 : i32
    return %c0_i32 : i32
  }
  func.func @transform_10(%arg0: i32) -> (i32, i32) {
    %c0_i32 = arith.constant 0 : i32
    %c0_i32_0 = arith.constant 0 : i32
    return %c0_i32, %arg0 : i32, i32
  }
}

</mosaic_0001>

<llo_original>
// kernel: tpu_custom_call.1
$region0: #{tpu_custom_call.1}
  #allocation0 [shape = 'u32[]', space=smem, size = 0x4, offset = 0x4, fixed_abs, tag = 'smem constant byte address 0x4 - core index']
  #allocation1 [shape = 'u32[144,128]{1,0:T(1,128)}', space=vmem, size = 0x12000, scoped, tag = 'internal scratch']
  #allocation2 [shape = 'f32[1]{0:T(128)S(6)}', space=smem, size = 0x200, scoped, tag = 'scoped memory for tpu_custom_call.1']
  %s0 = inlined_call_operand.vmem [shape: bf16[24,256], index: 0, kind: input, shape index: {}]
  %s1 = inlined_call_operand.vmem [shape: bf16[192,24], index: 1, kind: input, shape index: {}]
  %s2 = inlined_call_operand.vmem [shape: f32[192,1], index: 2, kind: input, shape index: {}]
  %s3 = inlined_call_operand.vmem [shape: bf16[64,128], index: 3, kind: input, shape index: {}]
  %s4 = inlined_call_operand.vmem [shape: f32[64,1], index: 4, kind: input, shape index: {}]
  %s5 = inlined_call_operand.vmem [shape: bf16[64,64], index: 5, kind: input, shape index: {}]
  %s6 = inlined_call_operand.vmem [shape: bf16[64,64], index: 6, kind: input, shape index: {}]
  %s7 = inlined_call_operand.vmem [shape: f32[64,1], index: 7, kind: input, shape index: {}]
  %s8 = inlined_call_operand.vmem [shape: f32[64,1], index: 8, kind: input, shape index: {}]
  %s9 = inlined_call_operand.<no memory space> [shape: f32[1], index: 9, kind: input, shape index: {}]
  %s10 = inlined_call_operand.hbm [shape: f32[1,256], index: 10, kind: output, shape index: {}]
  %s11 = sld [smem:[#allocation0]]
  $region50: #{tpu_custom_call.1} parent=0
    _
  %s13 = ssub.s32 1, %s11
  %s14 = scalar_select 0, %s13, %s11
  %15 = sst [smem:[#allocation2]] %s9
  $region1: #{tpu_custom_call.1} parent=0
    #allocation3 [shape = 'u8[1024]{0}', space=vmem, size = 0x400, scoped, tag = 'output window, operand 0, single buffered']
    #allocation4 [shape = 's32[1]{0}', space=sflag, size = 0x4, scoped, tag = 'scoped memory for tpu_custom_call.1']
    %16 = vsyncpa [#allocation4], 0
    // Predicated region
    $region2: #{tpu_custom_call.1} parent=1 // pred_check
      _
    $region3: #{tpu_custom_call.1} parent=1 // pred_check_branch
      %18 = sbr.rel (0) target = $region5
    $region4: #{tpu_custom_call.1} parent=1 // pred_region
      _
    $region5: #{tpu_custom_call.1} parent=1 // pred_fallthru
      _
    // Predicated region
    $region6: #{tpu_custom_call.1} parent=1 // pred_check
      _
    $region7: #{tpu_custom_call.1} parent=1 // pred_check_branch
      %20 = sbr.rel (0) target = $region9
    $region8: #{tpu_custom_call.1} parent=1 // pred_region
      _
    $region9: #{tpu_custom_call.1} parent=1 // pred_fallthru
      _
    // Predicated region
    $region10: #{tpu_custom_call.1} parent=1 // pred_check
      _
    $region11: #{tpu_custom_call.1} parent=1 // pred_check_branch
      %22 = sbr.rel (0) target = $region13
    $region12: #{tpu_custom_call.1} parent=1 // pred_region
      _
    $region13: #{tpu_custom_call.1} parent=1 // pred_fallthru
      _
    // Predicated region
    $region14: #{tpu_custom_call.1} parent=1 // pred_check
      _
    $region15: #{tpu_custom_call.1} parent=1 // pred_check_branch
      %24 = sbr.rel (0) target = $region17
    $region16: #{tpu_custom_call.1} parent=1 // pred_region
      _
    $region17: #{tpu_custom_call.1} parent=1 // pred_fallthru
      _
    // Predicated region
    $region18: #{tpu_custom_call.1} parent=1 // pred_check
      _
    $region19: #{tpu_custom_call.1} parent=1 // pred_check_branch
      %26 = sbr.rel (0) target = $region21
    $region20: #{tpu_custom_call.1} parent=1 // pred_region
      _
    $region21: #{tpu_custom_call.1} parent=1 // pred_fallthru
      _
    // Predicated region
    $region22: #{tpu_custom_call.1} parent=1 // pred_check
      _
    $region23: #{tpu_custom_call.1} parent=1 // pred_check_branch
      %28 = sbr.rel (0) target = $region25
    $region24: #{tpu_custom_call.1} parent=1 // pred_region
      _
    $region25: #{tpu_custom_call.1} parent=1 // pred_fallthru
      _
    // Predicated region
    $region26: #{tpu_custom_call.1} parent=1 // pred_check
      _
    $region27: #{tpu_custom_call.1} parent=1 // pred_check_branch
      %30 = sbr.rel (0) target = $region29
    $region28: #{tpu_custom_call.1} parent=1 // pred_region
      _
    $region29: #{tpu_custom_call.1} parent=1 // pred_fallthru
      _
    // Predicated region
    $region30: #{tpu_custom_call.1} parent=1 // pred_check
      _
    $region31: #{tpu_custom_call.1} parent=1 // pred_check_branch
      %32 = sbr.rel (0) target = $region33
    $region32: #{tpu_custom_call.1} parent=1 // pred_region
      _
    $region33: #{tpu_custom_call.1} parent=1 // pred_fallthru
      _
    // Predicated region
    $region34: #{tpu_custom_call.1} parent=1 // pred_check
      _
    $region35: #{tpu_custom_call.1} parent=1 // pred_check_branch
      %34 = sbr.rel (0) target = $region37
    $region36: #{tpu_custom_call.1} parent=1 // pred_region
      _
    $region37: #{tpu_custom_call.1} parent=1 // pred_fallthru
      _
    // Predicated region
    $region38: #{tpu_custom_call.1} parent=1 // pred_check
      _
    $region39: #{tpu_custom_call.1} parent=1 // pred_check_branch
      %36 = sbr.rel (0) target = $region41
    $region40: #{tpu_custom_call.1} parent=1 // pred_region
      _
    $region41: #{tpu_custom_call.1} parent=1 // pred_fallthru
      _
    %v38 = vld [vmem:[%s1] sm:$0xf]
    %v39 = vld [vmem:[%s1 + $0x4] sm:$0xf]
    %v40 = vld [vmem:[%s1 + $0x8] sm:$0xf]
    %v41 = vld [vmem:[%s1 + $0xc] sm:$0xf]
    %v42 = vld [vmem:[%s1 + $0x10] sm:$0xf]
    %v43 = vld [vmem:[%s1 + $0x14] sm:$0xf]
    %v44 = vld [vmem:[%s1 + $0x18] sm:$0xf]
    %v45 = vld [vmem:[%s1 + $0x1c] sm:$0xf]
    %v46 = vld [vmem:[%s1 + $0x20] sm:$0xf]
    %v47 = vld [vmem:[%s1 + $0x24] sm:$0xf]
    %v48 = vld [vmem:[%s1 + $0x28] sm:$0xf]
    %v49 = vld [vmem:[%s1 + $0x2c] sm:$0xf]
    %v50 = vld [vmem:[%s1 + $0x30] sm:$0xf]
    %v51 = vld [vmem:[%s1 + $0x34] sm:$0xf]
    %v52 = vld [vmem:[%s1 + $0x38] sm:$0xf]
    %v53 = vld [vmem:[%s1 + $0x3c] sm:$0xf]
    %v54 = vld [vmem:[%s1 + $0x40] sm:$0xf]
    %v55 = vld [vmem:[%s1 + $0x44] sm:$0xf]
    %v56 = vld [vmem:[%s1 + $0x48] sm:$0xf]
    %v57 = vld [vmem:[%s1 + $0x4c] sm:$0xf]
    %v58 = vld [vmem:[%s1 + $0x50] sm:$0xf]
    %v59 = vld [vmem:[%s1 + $0x54] sm:$0xf]
    %v60 = vld [vmem:[%s1 + $0x58] sm:$0xf]
    %v61 = vld [vmem:[%s1 + $0x5c] sm:$0xf]
    %v62 = vld [vmem:[%s0] sm:$0xff]
    %v63 = vld [vmem:[%s0 + $0x8] sm:$0xff]
    %v64 = vld [vmem:[%s0 + $0x10] sm:$0xff]
    %v65 = vld [vmem:[%s2] sm:$0xff]
    %v66 = vld [vmem:[%s2 + $0x8] sm:$0xff]
    %v67 = vld [vmem:[%s2 + $0x10] sm:$0xff]
    %v68 = vld [vmem:[%s2 + $0x18] sm:$0xff]
    %v69 = vld [vmem:[%s2 + $0x20] sm:$0xff]
    %v70 = vld [vmem:[%s2 + $0x28] sm:$0xff]
    %v71 = vld [vmem:[%s2 + $0x30] sm:$0xff]
    %v72 = vld [vmem:[%s2 + $0x38] sm:$0xff]
    %v73 = vld [vmem:[%s2 + $0x40] sm:$0xff]
    %v74 = vld [vmem:[%s2 + $0x48] sm:$0xff]
    %v75 = vld [vmem:[%s2 + $0x50] sm:$0xff]
    %v76 = vld [vmem:[%s2 + $0x58] sm:$0xff]
    %v77 = vld [vmem:[%s2 + $0x60] sm:$0xff]
    %v78 = vld [vmem:[%s2 + $0x68] sm:$0xff]
    %v79 = vld [vmem:[%s2 + $0x70] sm:$0xff]
    %v80 = vld [vmem:[%s2 + $0x78] sm:$0xff]
    %v81 = vld [vmem:[%s2 + $0x80] sm:$0xff]
    %v82 = vld [vmem:[%s2 + $0x88] sm:$0xff]
    %v83 = vld [vmem:[%s2 + $0x90] sm:$0xff]
    %v84 = vld [vmem:[%s2 + $0x98] sm:$0xff]
    %v85 = vld [vmem:[%s2 + $0xa0] sm:$0xff]
    %v86 = vld [vmem:[%s2 + $0xa8] sm:$0xff]
    %v87 = vld [vmem:[%s2 + $0xb0] sm:$0xff]
    %v88 = vld [vmem:[%s2 + $0xb8] sm:$0xff]
    %90 = vset.pattern.permute.xlu0 0
    %91 = vperm.xlu0 %90, %v65
    %v92 = vpop.permute.xlu0 %91
    %95 = vset.pattern.permute.xlu0 0
    %96 = vperm.xlu0 %95, %v66
    %v97 = vpop.permute.xlu0 %96
    %100 = vset.pattern.permute.xlu0 0
    %101 = vperm.xlu0 %100, %v67
    %v102 = vpop.permute.xlu0 %101
    %105 = vset.pattern.permute.xlu0 0
    %106 = vperm.xlu0 %105, %v68
    %v107 = vpop.permute.xlu0 %106
    %110 = vset.pattern.permute.xlu0 0
    %111 = vperm.xlu0 %110, %v69
    %v112 = vpop.permute.xlu0 %111
    %115 = vset.pattern.permute.xlu0 0
    %116 = vperm.xlu0 %115, %v70
    %v117 = vpop.permute.xlu0 %116
    %120 = vset.pattern.permute.xlu0 0
    %121 = vperm.xlu0 %120, %v71
    %v122 = vpop.permute.xlu0 %121
    %125 = vset.pattern.permute.xlu0 0
    %126 = vperm.xlu0 %125, %v72
    %v127 = vpop.permute.xlu0 %126
    %130 = vset.pattern.permute.xlu0 0
    %131 = vperm.xlu0 %130, %v73
    %v132 = vpop.permute.xlu0 %131
    %135 = vset.pattern.permute.xlu0 0
    %136 = vperm.xlu0 %135, %v74
    %v137 = vpop.permute.xlu0 %136
    %140 = vset.pattern.permute.xlu0 0
    %141 = vperm.xlu0 %140, %v75
    %v142 = vpop.permute.xlu0 %141
    %145 = vset.pattern.permute.xlu0 0
    %146 = vperm.xlu0 %145, %v76
    %v147 = vpop.permute.xlu0 %146
    %150 = vset.pattern.permute.xlu0 0
    %151 = vperm.xlu0 %150, %v77
    %v152 = vpop.permute.xlu0 %151
    %155 = vset.pattern.permute.xlu0 0
    %156 = vperm.xlu0 %155, %v78
    %v157 = vpop.permute.xlu0 %156
    %160 = vset.pattern.permute.xlu0 0
    %161 = vperm.xlu0 %160, %v79
    %v162 = vpop.permute.xlu0 %161
    %165 = vset.pattern.permute.xlu0 0
    %166 = vperm.xlu0 %165, %v80
    %v167 = vpop.permute.xlu0 %166
    %170 = vset.pattern.permute.xlu0 0
    %171 = vperm.xlu0 %170, %v81
    %v172 = vpop.permute.xlu0 %171
    %175 = vset.pattern.permute.xlu0 0
    %176 = vperm.xlu0 %175, %v82
    %v177 = vpop.permute.xlu0 %176
    %180 = vset.pattern.permute.xlu0 0
    %181 = vperm.xlu0 %180, %v83
    %v182 = vpop.permute.xlu0 %181
    %185 = vset.pattern.permute.xlu0 0
    %186 = vperm.xlu0 %185, %v84
    %v187 = vpop.permute.xlu0 %186
    %190 = vset.pattern.permute.xlu0 0
    %191 = vperm.xlu0 %190, %v85
    %v192 = vpop.permute.xlu0 %191
    %195 = vset.pattern.permute.xlu0 0
    %196 = vperm.xlu0 %195, %v86
    %v197 = vpop.permute.xlu0 %196
    %200 = vset.pattern.permute.xlu0 0
    %201 = vperm.xlu0 %200, %v87
    %v202 = vpop.permute.xlu0 %201
    %205 = vset.pattern.permute.xlu0 0
    %206 = vperm.xlu0 %205, %v88
    %v207 = vpop.permute.xlu0 %206
    %v233 = vunpack.c.l.b16 %v38
    %v234 = vunpack.c.l.b16 %v39
    %v235 = vunpack.c.l.b16 %v40
    %v236 = vunpack.c.l.b16 %v41
    %v237 = vunpack.c.l.b16 %v42
    %v238 = vunpack.c.l.b16 %v43
    %v239 = vunpack.c.l.b16 %v44
    %v240 = vunpack.c.l.b16 %v45
    %v241 = vunpack.c.l.b16 %v46
    %v242 = vunpack.c.l.b16 %v47
    %v243 = vunpack.c.l.b16 %v48
    %v244 = vunpack.c.l.b16 %v49
    %v245 = vunpack.c.l.b16 %v50
    %v246 = vunpack.c.l.b16 %v51
    %v247 = vunpack.c.l.b16 %v52
    %v248 = vunpack.c.l.b16 %v53
    %v249 = vunpack.c.l.b16 %v54
    %v250 = vunpack.c.l.b16 %v55
    %v251 = vunpack.c.l.b16 %v56
    %v252 = vunpack.c.l.b16 %v57
    %v253 = vunpack.c.l.b16 %v58
    %v254 = vunpack.c.l.b16 %v59
    %v255 = vunpack.c.l.b16 %v60
    %v256 = vunpack.c.l.b16 %v61
    %v257 = vpack.c.b16 %v234, %v233
    %v258 = vpack.c.b16 %v236, %v235
    %v259 = vpack.c.b16 %v238, %v237
    %v260 = vpack.c.b16 %v240, %v239
    %v261 = vpack.c.b16 %v242, %v241
    %v262 = vpack.c.b16 %v244, %v243
    %v263 = vpack.c.b16 %v246, %v245
    %v264 = vpack.c.b16 %v248, %v247
    %v265 = vpack.c.b16 %v250, %v249
    %v266 = vpack.c.b16 %v252, %v251
    %v267 = vpack.c.b16 %v254, %v253
    %v268 = vpack.c.b16 %v256, %v255
    %v272 = vunpack.c.l.b16 %v62
    %v273 = vunpack.c.h.b16 %v62
    %v274 = vunpack.c.l.b16 %v63
    %v275 = vunpack.c.h.b16 %v63
    %v276 = vunpack.c.l.b16 %v64
    %v277 = vunpack.c.h.b16 %v64
    %v278 = vpack.c.b16 %v274, %v272
    %v279 = vpack.c.b16 %v275, %v273
    %v280 = vpack.c.b16 %v276, %v276
    %v281 = vpack.c.b16 %v277, %v277
    %vm284 = vcmask 195584
    %v286 = vsel %vm284, %v257, 0
    %v289 = vsel %vm284, %v258, 0
    %v292 = vsel %vm284, %v259, 0
    %v295 = vsel %vm284, %v260, 0
    %v298 = vsel %vm284, %v261, 0
    %v301 = vsel %vm284, %v262, 0
    %v304 = vsel %vm284, %v263, 0
    %v307 = vsel %vm284, %v264, 0
    %v310 = vsel %vm284, %v265, 0
    %v313 = vsel %vm284, %v266, 0
    %v316 = vsel %vm284, %v267, 0
    %v319 = vsel %vm284, %v268, 0
    %vm321 = vcmask 1043456
    %v323 = vsel %vm321, %v280, 0
    %v326 = vsel %vm321, %v281, 0
    %328 = vmatprep.subr.bf16.mxu0 %v279
    %329 = vmatpush1.bf16.msra.mxu0 %v278
    %330 = vmatprep.subr.bf16.mxu0 %v326
    %331 = vmatpush1.bf16.msra.mxu0 %v323
    %332 = vmatprep.subr.bf16.mxu0 0
    %333 = vmatpush1.bf16.msra.mxu0 0
    %334 = vmatprep.subr.bf16.mxu0 0
    %335 = vmatpush1.bf16.msra.mxu0 0
    %336 = vmatprep.subr.bf16.mxu0 0
    %337 = vmatpush1.bf16.msra.mxu0 0
    %338 = vmatprep.subr.bf16.mxu0 0
    %339 = vmatpush1.bf16.msra.mxu0 0
    %340 = vmatprep.subr.bf16.mxu0 0
    %341 = vmatpush1.bf16.msra.mxu0 0
    %342 = vmatprep.subr.bf16.mxu0 0
    %343 = vmatpush1.bf16.msra.mxu0 0
    %344 = vmatprep.subr.bf16.mxu0 0
    %345 = vmatpush1.bf16.msra.mxu0 0
    %346 = vmatprep.subr.bf16.mxu0 0
    %347 = vmatpush1.bf16.msra.mxu0 0
    %348 = vmatprep.subr.bf16.mxu0 0
    %349 = vmatpush1.bf16.msra.mxu0 0
    %350 = vmatprep.subr.bf16.mxu0 0
    %351 = vmatpush1.bf16.msra.mxu0 0
    %352 = vmatprep.subr.bf16.mxu0 0
    %353 = vmatpush1.bf16.msra.mxu0 0
    %354 = vmatprep.subr.bf16.mxu0 0
    %355 = vmatpush1.bf16.msra.mxu0 0
    %356 = vmatprep.subr.bf16.mxu0 0
    %357 = vmatpush1.bf16.msra.mxu0 0
    %358 = vmatprep.subr.bf16.mxu0 0
    %359 = vmatpush1.bf16.msra.mxu0 0
    %360 = vmatprep.mubr.bf16.mxu0 0
    %361 = vmatmul.mubr.bf16.gmra.mrb[0].mxu0 %v286
    %v362 = vpop.f32.mrb[0].mxu0
    %v363 = vadd.f32 %v92, %v362
    %v364 = vpop.f32.mrb[0].mxu0
    %v365 = vadd.f32 %v92, %v364
    %v366 = vpop.f32.mrb[0].mxu0
    %v367 = vadd.f32 %v97, %v366
    %v368 = vpop.f32.mrb[0].mxu0
    %v369 = vadd.f32 %v97, %v368
    %370 = vmatprep.mubr.bf16.mxu0 0
    %371 = vmatmul.mubr.bf16.gmra.mrb[0].mxu0 %v289
    %v372 = vpop.f32.mrb[0].mxu0
    %v373 = vadd.f32 %v102, %v372
    %v374 = vpop.f32.mrb[0].mxu0
    %v375 = vadd.f32 %v102, %v374
    %v376 = vpop.f32.mrb[0].mxu0
    %v377 = vadd.f32 %v107, %v376
    %v378 = vpop.f32.mrb[0].mxu0
    %v379 = vadd.f32 %v107, %v378
    %380 = vmatprep.mubr.bf16.mxu0 0
    %381 = vmatmul.mubr.bf16.gmra.mrb[0].mxu0 %v292
    %v382 = vpop.f32.mrb[0].mxu0
    %v383 = vadd.f32 %v112, %v382
    %v384 = vpop.f32.mrb[0].mxu0
    %v385 = vadd.f32 %v112, %v384
    %v386 = vpop.f32.mrb[0].mxu0
    %v387 = vadd.f32 %v117, %v386
    %v388 = vpop.f32.mrb[0].mxu0
    %v389 = vadd.f32 %v117, %v388
    %390 = vmatprep.mubr.bf16.mxu0 0
    %391 = vmatmul.mubr.bf16.gmra.mrb[0].mxu0 %v295
    %v392 = vpop.f32.mrb[0].mxu0
    %v393 = vadd.f32 %v122, %v392
    %v394 = vpop.f32.mrb[0].mxu0
    %v395 = vadd.f32 %v122, %v394
    %v396 = vpop.f32.mrb[0].mxu0
    %v397 = vadd.f32 %v127, %v396
    %v398 = vpop.f32.mrb[0].mxu0
    %v399 = vadd.f32 %v127, %v398
    %400 = vmatprep.mubr.bf16.mxu0 0
    %401 = vmatmul.mubr.bf16.gmra.mrb[0].mxu0 %v298
    %v402 = vpop.f32.mrb[0].mxu0
    %v403 = vadd.f32 %v132, %v402
    %v404 = vpop.f32.mrb[0].mxu0
    %v405 = vadd.f32 %v132, %v404
    %v406 = vpop.f32.mrb[0].mxu0
    %v407 = vadd.f32 %v137, %v406
    %v408 = vpop.f32.mrb[0].mxu0
    %v409 = vadd.f32 %v137, %v408
    %410 = vmatprep.mubr.bf16.mxu0 0
    %411 = vmatmul.mubr.bf16.gmra.mrb[0].mxu0 %v301
    %v412 = vpop.f32.mrb[0].mxu0
    %v413 = vadd.f32 %v142, %v412
    %v414 = vpop.f32.mrb[0].mxu0
    %v415 = vadd.f32 %v142, %v414
    %v416 = vpop.f32.mrb[0].mxu0
    %v417 = vadd.f32 %v147, %v416
    %v418 = vpop.f32.mrb[0].mxu0
    %v419 = vadd.f32 %v147, %v418
    %420 = vmatprep.mubr.bf16.mxu0 0
    %421 = vmatmul.mubr.bf16.gmra.mrb[0].mxu0 %v304
    %v422 = vpop.f32.mrb[0].mxu0
    %v423 = vadd.f32 %v152, %v422
    %v424 = vpop.f32.mrb[0].mxu0
    %v425 = vadd.f32 %v152, %v424
    %v426 = vpop.f32.mrb[0].mxu0
    %v427 = vadd.f32 %v157, %v426
    %v428 = vpop.f32.mrb[0].mxu0
    %v429 = vadd.f32 %v157, %v428
    %430 = vmatprep.mubr.bf16.mxu0 0
    %431 = vmatmul.mubr.bf16.gmra.mrb[0].mxu0 %v307
    %v432 = vpop.f32.mrb[0].mxu0
    %v433 = vadd.f32 %v162, %v432
    %v434 = vpop.f32.mrb[0].mxu0
    %v435 = vadd.f32 %v162, %v434
    %v436 = vpop.f32.mrb[0].mxu0
    %v437 = vadd.f32 %v167, %v436
    %v438 = vpop.f32.mrb[0].mxu0
    %v439 = vadd.f32 %v167, %v438
    %440 = vmatprep.mubr.bf16.mxu0 0
    %441 = vmatmul.mubr.bf16.gmra.mrb[0].mxu0 %v310
    %v442 = vpop.f32.mrb[0].mxu0
    %v443 = vadd.f32 %v172, %v442
    %v444 = vpop.f32.mrb[0].mxu0
    %v445 = vadd.f32 %v172, %v444
    %v446 = vpop.f32.mrb[0].mxu0
    %v447 = vadd.f32 %v177, %v446
    %v448 = vpop.f32.mrb[0].mxu0
    %v449 = vadd.f32 %v177, %v448
    %450 = vmatprep.mubr.bf16.mxu0 0
    %451 = vmatmul.mubr.bf16.gmra.mrb[0].mxu0 %v313
    %v452 = vpop.f32.mrb[0].mxu0
    %v453 = vadd.f32 %v182, %v452
    %v454 = vpop.f32.mrb[0].mxu0
    %v455 = vadd.f32 %v182, %v454
    %v456 = vpop.f32.mrb[0].mxu0
    %v457 = vadd.f32 %v187, %v456
    %v458 = vpop.f32.mrb[0].mxu0
    %v459 = vadd.f32 %v187, %v458
    %460 = vmatprep.mubr.bf16.mxu0 0
    %461 = vmatmul.mubr.bf16.gmra.mrb[0].mxu0 %v316
    %v462 = vpop.f32.mrb[0].mxu0
    %v463 = vadd.f32 %v192, %v462
    %v464 = vpop.f32.mrb[0].mxu0
    %v465 = vadd.f32 %v192, %v464
    %v466 = vpop.f32.mrb[0].mxu0
    %v467 = vadd.f32 %v197, %v466
    %v468 = vpop.f32.mrb[0].mxu0
    %v469 = vadd.f32 %v197, %v468
    %470 = vmatprep.mubr.bf16.mxu0 0
    %471 = vmatmul.mubr.bf16.gmra.mrb[0].mxu0 %v319
    %v472 = vpop.f32.mrb[0].mxu0
    %v473 = vadd.f32 %v202, %v472
    %v474 = vpop.f32.mrb[0].mxu0
    %v475 = vadd.f32 %v202, %v474
    %v476 = vpop.f32.mrb[0].mxu0
    %v477 = vadd.f32 %v207, %v476
    %v478 = vpop.f32.mrb[0].mxu0
    %v479 = vadd.f32 %v207, %v478
    %480 = vdwg.mxu0
    %v481 = vmax.f32 %v363, 0.0
    %v482 = vmax.f32 %v365, 0.0
    %v483 = vmax.f32 %v367, 0.0
    %v484 = vmax.f32 %v369, 0.0
    %v485 = vmax.f32 %v373, 0.0
    %v486 = vmax.f32 %v375, 0.0
    %v487 = vmax.f32 %v377, 0.0
    %v488 = vmax.f32 %v379, 0.0
    %v489 = vmax.f32 %v383, 0.0
    %v490 = vmax.f32 %v385, 0.0
    %v491 = vmax.f32 %v387, 0.0
    %v492 = vmax.f32 %v389, 0.0
    %v493 = vmax.f32 %v393, 0.0
    %v494 = vmax.f32 %v395, 0.0
    %v495 = vmax.f32 %v397, 0.0
    %v496 = vmax.f32 %v399, 0.0
    %v497 = vmax.f32 %v403, 0.0
    %v498 = vmax.f32 %v405, 0.0
    %v499 = vmax.f32 %v407, 0.0
    %v500 = vmax.f32 %v409, 0.0
    %v501 = vmax.f32 %v413, 0.0
    %v502 = vmax.f32 %v415, 0.0
    %v503 = vmax.f32 %v417, 0.0
    %v504 = vmax.f32 %v419, 0.0
    %v505 = vmax.f32 %v423, 0.0
    %v506 = vmax.f32 %v425, 0.0
    %v507 = vmax.f32 %v427, 0.0
    %v508 = vmax.f32 %v429, 0.0
    %v509 = vmax.f32 %v433, 0.0
    %v510 = vmax.f32 %v435, 0.0
    %v511 = vmax.f32 %v437, 0.0
    %v512 = vmax.f32 %v439, 0.0
    %v513 = vmax.f32 %v443, 0.0
    %v514 = vmax.f32 %v445, 0.0
    %v515 = vmax.f32 %v447, 0.0
    %v516 = vmax.f32 %v449, 0.0
    %v517 = vmax.f32 %v453, 0.0
    %v518 = vmax.f32 %v455, 0.0
    %v519 = vmax.f32 %v457, 0.0
    %v520 = vmax.f32 %v459, 0.0
    %v521 = vmax.f32 %v463, 0.0
    %v522 = vmax.f32 %v465, 0.0
    %v523 = vmax.f32 %v467, 0.0
    %v524 = vmax.f32 %v469, 0.0
    %v525 = vmax.f32 %v473, 0.0
    %v526 = vmax.f32 %v475, 0.0
    %v527 = vmax.f32 %v477, 0.0
    %v528 = vmax.f32 %v479, 0.0
    %v529 = vpack.c.bf16 %v483, %v481
    %v530 = vpack.c.bf16 %v484, %v482
    %v531 = vpack.c.bf16 %v487, %v485
    %v532 = vpack.c.bf16 %v488, %v486
    %v533 = vpack.c.bf16 %v491, %v489
    %v534 = vpack.c.bf16 %v492, %v490
    %v535 = vpack.c.bf16 %v495, %v493
    %v536 = vpack.c.bf16 %v496, %v494
    %v537 = vpack.c.bf16 %v499, %v497
    %v538 = vpack.c.bf16 %v500, %v498
    %v539 = vpack.c.bf16 %v503, %v501
    %v540 = vpack.c.bf16 %v504, %v502
    %v541 = vpack.c.bf16 %v507, %v505
    %v542 = vpack.c.bf16 %v508, %v506
    %v543 = vpack.c.bf16 %v511, %v509
    %v544 = vpack.c.bf16 %v512, %v510
    %v545 = vpack.c.bf16 %v515, %v513
    %v546 = vpack.c.bf16 %v516, %v514
    %v547 = vpack.c.bf16 %v519, %v517
    %v548 = vpack.c.bf16 %v520, %v518
    %v549 = vpack.c.bf16 %v523, %v521
    %v550 = vpack.c.bf16 %v524, %v522
    %v551 = vpack.c.bf16 %v527, %v525
    %v552 = vpack.c.bf16 %v528, %v526
    %v553 = vld [vmem:[%s3] sm:$0xf]
    %v554 = vld [vmem:[%s3 + $0x4] sm:$0xf]
    %v555 = vld [vmem:[%s3 + $0x8] sm:$0xf]
    %v556 = vld [vmem:[%s3 + $0xc] sm:$0xf]
    %v557 = vld [vmem:[%s3 + $0x10] sm:$0xf]
    %v558 = vld [vmem:[%s3 + $0x14] sm:$0xf]
    %v559 = vld [vmem:[%s3 + $0x18] sm:$0xf]
    %v560 = vld [vmem:[%s3 + $0x1c] sm:$0xf]
    %v561 = vld [vmem:[%s4] sm:$0xff]
    %v562 = vld [vmem:[%s4 + $0x8] sm:$0xff]
    %v563 = vld [vmem:[%s4 + $0x10] sm:$0xff]
    %v564 = vld [vmem:[%s4 + $0x18] sm:$0xff]
    %v565 = vld [vmem:[%s4 + $0x20] sm:$0xff]
    %v566 = vld [vmem:[%s4 + $0x28] sm:$0xff]
    %v567 = vld [vmem:[%s4 + $0x30] sm:$0xff]
    %v568 = vld [vmem:[%s4 + $0x38] sm:$0xff]
    %570 = vset.pattern.permute.xlu0 0
    %571 = vperm.xlu0 %570, %v561
    %v572 = vpop.permute.xlu0 %571
    %575 = vset.pattern.permute.xlu0 0
    %576 = vperm.xlu0 %575, %v562
    %v577 = vpop.permute.xlu0 %576
    %580 = vset.pattern.permute.xlu0 0
    %581 = vperm.xlu0 %580, %v563
    %v582 = vpop.permute.xlu0 %581
    %585 = vset.pattern.permute.xlu0 0
    %586 = vperm.xlu0 %585, %v564
    %v587 = vpop.permute.xlu0 %586
    %590 = vset.pattern.permute.xlu0 0
    %591 = vperm.xlu0 %590, %v565
    %v592 = vpop.permute.xlu0 %591
    %595 = vset.pattern.permute.xlu0 0
    %596 = vperm.xlu0 %595, %v566
    %v597 = vpop.permute.xlu0 %596
    %600 = vset.pattern.permute.xlu0 0
    %601 = vperm.xlu0 %600, %v567
    %v602 = vpop.permute.xlu0 %601
    %605 = vset.pattern.permute.xlu0 0
    %606 = vperm.xlu0 %605, %v568
    %v607 = vpop.permute.xlu0 %606
    %v617 = vunpack.c.l.b16 %v553
    %v618 = vunpack.c.l.b16 %v554
    %v619 = vunpack.c.l.b16 %v555
    %v620 = vunpack.c.l.b16 %v556
    %v621 = vunpack.c.l.b16 %v557
    %v622 = vunpack.c.l.b16 %v558
    %v623 = vunpack.c.l.b16 %v559
    %v624 = vunpack.c.l.b16 %v560
    %v625 = vpack.c.b16 %v618, %v617
    %v626 = vpack.c.b16 %v620, %v619
    %v627 = vpack.c.b16 %v622, %v621
    %v628 = vpack.c.b16 %v624, %v623
    %633 = vmatprep.subr.bf16.mxu0 %v530
    %634 = vmatpush1.bf16.msra.mxu0 %v529
    %635 = vmatprep.subr.bf16.mxu0 %v532
    %636 = vmatpush1.bf16.msra.mxu0 %v531
    %637 = vmatprep.subr.bf16.mxu0 %v534
    %638 = vmatpush1.bf16.msra.mxu0 %v533
    %639 = vmatprep.subr.bf16.mxu0 %v536
    %640 = vmatpush1.bf16.msra.mxu0 %v535
    %641 = vmatprep.subr.bf16.mxu0 %v538
    %642 = vmatpush1.bf16.msra.mxu0 %v537
    %643 = vmatprep.subr.bf16.mxu0 %v540
    %644 = vmatpush1.bf16.msra.mxu0 %v539
    %645 = vmatprep.subr.bf16.mxu0 %v542
    %646 = vmatpush1.bf16.msra.mxu0 %v541
    %647 = vmatprep.subr.bf16.mxu0 %v544
    %648 = vmatpush1.bf16.msra.mxu0 %v543
    %649 = vmatprep.subr.bf16.mxu0 0
    %650 = vmatpush1.bf16.msra.mxu0 0
    %651 = vmatprep.subr.bf16.mxu0 0
    %652 = vmatpush1.bf16.msra.mxu0 0
    %653 = vmatprep.subr.bf16.mxu0 0
    %654 = vmatpush1.bf16.msra.mxu0 0
    %655 = vmatprep.subr.bf16.mxu0 0
    %656 = vmatpush1.bf16.msra.mxu0 0
    %657 = vmatprep.subr.bf16.mxu0 0
    %658 = vmatpush1.bf16.msra.mxu0 0
    %659 = vmatprep.subr.bf16.mxu0 0
    %660 = vmatpush1.bf16.msra.mxu0 0
    %661 = vmatprep.subr.bf16.mxu0 0
    %662 = vmatpush1.bf16.msra.mxu0 0
    %663 = vmatprep.subr.bf16.mxu0 0
    %664 = vmatpush1.bf16.msra.mxu0 0
    %665 = vmatprep.mubr.bf16.mxu0 0
    %666 = vmatmul.mubr.bf16.gmra.mrb[0].mxu0 %v625
    %v667 = vpop.f32.mrb[0].mxu0
    %v668 = vadd.f32 %v572, %v667
    %v669 = vpop.f32.mrb[0].mxu0
    %v670 = vadd.f32 %v572, %v669
    %v671 = vpop.f32.mrb[0].mxu0
    %v672 = vadd.f32 %v577, %v671
    %v673 = vpop.f32.mrb[0].mxu0
    %v674 = vadd.f32 %v577, %v673
    %675 = vmatprep.mubr.bf16.mxu0 0
    %676 = vmatmul.mubr.bf16.gmra.mrb[0].mxu0 %v626
    %v677 = vpop.f32.mrb[0].mxu0
    %v678 = vadd.f32 %v582, %v677
    %v679 = vpop.f32.mrb[0].mxu0
    %v680 = vadd.f32 %v582, %v679
    %v681 = vpop.f32.mrb[0].mxu0
    %v682 = vadd.f32 %v587, %v681
    %v683 = vpop.f32.mrb[0].mxu0
    %v684 = vadd.f32 %v587, %v683
    %685 = vmatprep.mubr.bf16.mxu0 0
    %686 = vmatmul.mubr.bf16.gmra.mrb[0].mxu0 %v627
    %v687 = vpop.f32.mrb[0].mxu0
    %v688 = vadd.f32 %v592, %v687
    %v689 = vpop.f32.mrb[0].mxu0
    %v690 = vadd.f32 %v592, %v689
    %v691 = vpop.f32.mrb[0].mxu0
    %v692 = vadd.f32 %v597, %v691
    %v693 = vpop.f32.mrb[0].mxu0
    %v694 = vadd.f32 %v597, %v693
    %695 = vmatprep.mubr.bf16.mxu0 0
    %696 = vmatmul.mubr.bf16.gmra.mrb[0].mxu0 %v628
    %v697 = vpop.f32.mrb[0].mxu0
    %v698 = vadd.f32 %v602, %v697
    %v699 = vpop.f32.mrb[0].mxu0
    %v700 = vadd.f32 %v602, %v699
    %v701 = vpop.f32.mrb[0].mxu0
    %v702 = vadd.f32 %v607, %v701
    %v703 = vpop.f32.mrb[0].mxu0
    %v704 = vadd.f32 %v607, %v703
    %705 = vdwg.mxu0
    %v706 = vmax.f32 %v668, 0.0
    %v707 = vmax.f32 %v670, 0.0
    %v708 = vmax.f32 %v672, 0.0
    %v709 = vmax.f32 %v674, 0.0
    %v710 = vmax.f32 %v678, 0.0
    %v711 = vmax.f32 %v680, 0.0
    %v712 = vmax.f32 %v682, 0.0
    %v713 = vmax.f32 %v684, 0.0
    %v714 = vmax.f32 %v688, 0.0
    %v715 = vmax.f32 %v690, 0.0
    %v716 = vmax.f32 %v692, 0.0
    %v717 = vmax.f32 %v694, 0.0
    %v718 = vmax.f32 %v698, 0.0
    %v719 = vmax.f32 %v700, 0.0
    %v720 = vmax.f32 %v702, 0.0
    %v721 = vmax.f32 %v704, 0.0
    %v722 = vpack.c.bf16 %v708, %v706
    %v723 = vpack.c.bf16 %v709, %v707
    %v724 = vpack.c.bf16 %v712, %v710
    %v725 = vpack.c.bf16 %v713, %v711
    %v726 = vpack.c.bf16 %v716, %v714
    %v727 = vpack.c.bf16 %v717, %v715
    %v728 = vpack.c.bf16 %v720, %v718
    %v729 = vpack.c.bf16 %v721, %v719
    %v730 = vld [vmem:[%s5] sm:$0xf]
    %v731 = vld [vmem:[%s5 + $0x4] sm:$0xf]
    %v732 = vld [vmem:[%s5 + $0x8] sm:$0xf]
    %v733 = vld [vmem:[%s5 + $0xc] sm:$0xf]
    %v734 = vld [vmem:[%s5 + $0x10] sm:$0xf]
    %v735 = vld [vmem:[%s5 + $0x14] sm:$0xf]
    %v736 = vld [vmem:[%s5 + $0x18] sm:$0xf]
    %v737 = vld [vmem:[%s5 + $0x1c] sm:$0xf]
    %v738 = vld [vmem:[%s6] sm:$0xf]
    %v739 = vld [vmem:[%s6 + $0x4] sm:$0xf]
    %v740 = vld [vmem:[%s6 + $0x8] sm:$0xf]
    %v741 = vld [vmem:[%s6 + $0xc] sm:$0xf]
    %v742 = vld [vmem:[%s6 + $0x10] sm:$0xf]
    %v743 = vld [vmem:[%s6 + $0x14] sm:$0xf]
    %v744 = vld [vmem:[%s6 + $0x18] sm:$0xf]
    %v745 = vld [vmem:[%s6 + $0x1c] sm:$0xf]
    %v754 = vunpack.c.l.b16 %v738
    %v755 = vunpack.c.l.b16 %v739
    %v756 = vunpack.c.l.b16 %v740
    %v757 = vunpack.c.l.b16 %v741
    %v758 = vunpack.c.l.b16 %v742
    %v759 = vunpack.c.l.b16 %v743
    %v760 = vunpack.c.l.b16 %v744
    %v761 = vunpack.c.l.b16 %v745
    %v762 = vpack.c.b16 %v755, %v754
    %v763 = vpack.c.b16 %v757, %v756
    %v764 = vpack.c.b16 %v759, %v758
    %v765 = vpack.c.b16 %v761, %v760
    %vm766 = vcmask 523264
    %v768 = vsel %vm766, %v762, 0
    %v771 = vsel %vm766, %v763, 0
    %v774 = vsel %vm766, %v764, 0
    %v777 = vsel %vm766, %v765, 0
    %779 = vmatprep.subr.bf16.mxu0 %v546
    %780 = vmatpush1.bf16.msra.mxu0 %v545
    %781 = vmatprep.subr.bf16.mxu0 %v548
    %782 = vmatpush1.bf16.msra.mxu0 %v547
    %783 = vmatprep.subr.bf16.mxu0 %v550
    %784 = vmatpush1.bf16.msra.mxu0 %v549
    %785 = vmatprep.subr.bf16.mxu0 %v552
    %786 = vmatpush1.bf16.msra.mxu0 %v551
    %787 = vmatprep.subr.bf16.mxu0 0
    %788 = vmatpush1.bf16.msra.mxu0 0
    %789 = vmatprep.subr.bf16.mxu0 0
    %790 = vmatpush1.bf16.msra.mxu0 0
    %791 = vmatprep.subr.bf16.mxu0 0
    %792 = vmatpush1.bf16.msra.mxu0 0
    %793 = vmatprep.subr.bf16.mxu0 0
    %794 = vmatpush1.bf16.msra.mxu0 0
    %795 = vmatprep.subr.bf16.mxu0 0
    %796 = vmatpush1.bf16.msra.mxu0 0
    %797 = vmatprep.subr.bf16.mxu0 0
    %798 = vmatpush1.bf16.msra.mxu0 0
    %799 = vmatprep.subr.bf16.mxu0 0
    %800 = vmatpush1.bf16.msra.mxu0 0
    %801 = vmatprep.subr.bf16.mxu0 0
    %802 = vmatpush1.bf16.msra.mxu0 0
    %803 = vmatprep.subr.bf16.mxu0 0
    %804 = vmatpush1.bf16.msra.mxu0 0
    %805 = vmatprep.subr.bf16.mxu0 0
    %806 = vmatpush1.bf16.msra.mxu0 0
    %807 = vmatprep.subr.bf16.mxu0 0
    %808 = vmatpush1.bf16.msra.mxu0 0
    %809 = vmatprep.subr.bf16.mxu0 0
    %810 = vmatpush1.bf16.msra.mxu0 0
    %811 = vmatprep.mubr.bf16.mxu0 0
    %812 = vmatmul.mubr.bf16.gmra.mrb[0].mxu0 %v768
    %v813 = vpop.f32.mrb[0].mxu0
    %v814 = vadd.f32 0.0, %v813
    %v815 = vpop.f32.mrb[0].mxu0
    %v816 = vadd.f32 0.0, %v815
    %v817 = vpop.f32.mrb[0].mxu0
    %v818 = vadd.f32 0.0, %v817
    %v819 = vpop.f32.mrb[0].mxu0
    %v820 = vadd.f32 0.0, %v819
    %821 = vmatprep.mubr.bf16.mxu0 0
    %822 = vmatmul.mubr.bf16.gmra.mrb[0].mxu0 %v771
    %v823 = vpop.f32.mrb[0].mxu0
    %v824 = vadd.f32 0.0, %v823
    %v825 = vpop.f32.mrb[0].mxu0
    %v826 = vadd.f32 0.0, %v825
    %v827 = vpop.f32.mrb[0].mxu0
    %v828 = vadd.f32 0.0, %v827
    %v829 = vpop.f32.mrb[0].mxu0
    %v830 = vadd.f32 0.0, %v829
    %831 = vmatprep.mubr.bf16.mxu0 0
    %832 = vmatmul.mubr.bf16.gmra.mrb[0].mxu0 %v774
    %v833 = vpop.f32.mrb[0].mxu0
    %v834 = vadd.f32 0.0, %v833
    %v835 = vpop.f32.mrb[0].mxu0
    %v836 = vadd.f32 0.0, %v835
    %v837 = vpop.f32.mrb[0].mxu0
    %v838 = vadd.f32 0.0, %v837
    %v839 = vpop.f32.mrb[0].mxu0
    %v840 = vadd.f32 0.0, %v839
    %841 = vmatprep.mubr.bf16.mxu0 0
    %842 = vmatmul.mubr.bf16.gmra.mrb[0].mxu0 %v777
    %v843 = vpop.f32.mrb[0].mxu0
    %v844 = vadd.f32 0.0, %v843
    %v845 = vpop.f32.mrb[0].mxu0
    %v846 = vadd.f32 0.0, %v845
    %v847 = vpop.f32.mrb[0].mxu0
    %v848 = vadd.f32 0.0, %v847
    %v849 = vpop.f32.mrb[0].mxu0
    %v850 = vadd.f32 0.0, %v849
    %851 = vdwg.mxu0
    %v860 = vunpack.c.l.b16 %v730
    %v861 = vunpack.c.l.b16 %v731
    %v862 = vunpack.c.l.b16 %v732
    %v863 = vunpack.c.l.b16 %v733
    %v864 = vunpack.c.l.b16 %v734
    %v865 = vunpack.c.l.b16 %v735
    %v866 = vunpack.c.l.b16 %v736
    %v867 = vunpack.c.l.b16 %v737
    %v868 = vpack.c.b16 %v861, %v860
    %v869 = vpack.c.b16 %v863, %v862
    %v870 = vpack.c.b16 %v865, %v864
    %v871 = vpack.c.b16 %v867, %v866
    %v873 = vsel %vm766, %v868, 0
    %v876 = vsel %vm766, %v869, 0
    %v879 = vsel %vm766, %v870, 0
    %v882 = vsel %vm766, %v871, 0
    %884 = vmatprep.subr.bf16.mxu0 %v723
    %885 = vmatpush1.bf16.msra.mxu0 %v722
    %886 = vmatprep.subr.bf16.mxu0 %v725
    %887 = vmatpush1.bf16.msra.mxu0 %v724
    %888 = vmatprep.subr.bf16.mxu0 %v727
    %889 = vmatpush1.bf16.msra.mxu0 %v726
    %890 = vmatprep.subr.bf16.mxu0 %v729
    %891 = vmatpush1.bf16.msra.mxu0 %v728
    %892 = vmatprep.subr.bf16.mxu0 0
    %893 = vmatpush1.bf16.msra.mxu0 0
    %894 = vmatprep.subr.bf16.mxu0 0
    %895 = vmatpush1.bf16.msra.mxu0 0
    %896 = vmatprep.subr.bf16.mxu0 0
    %897 = vmatpush1.bf16.msra.mxu0 0
    %898 = vmatprep.subr.bf16.mxu0 0
    %899 = vmatpush1.bf16.msra.mxu0 0
    %900 = vmatprep.subr.bf16.mxu0 0
    %901 = vmatpush1.bf16.msra.mxu0 0
    %902 = vmatprep.subr.bf16.mxu0 0
    %903 = vmatpush1.bf16.msra.mxu0 0
    %904 = vmatprep.subr.bf16.mxu0 0
    %905 = vmatpush1.bf16.msra.mxu0 0
    %906 = vmatprep.subr.bf16.mxu0 0
    %907 = vmatpush1.bf16.msra.mxu0 0
    %908 = vmatprep.subr.bf16.mxu0 0
    %909 = vmatpush1.bf16.msra.mxu0 0
    %910 = vmatprep.subr.bf16.mxu0 0
    %911 = vmatpush1.bf16.msra.mxu0 0
    %912 = vmatprep.subr.bf16.mxu0 0
    %913 = vmatpush1.bf16.msra.mxu0 0
    %914 = vmatprep.subr.bf16.mxu0 0
    %915 = vmatpush1.bf16.msra.mxu0 0
    %916 = vmatprep.mubr.bf16.mxu0 0
    %917 = vmatmul.mubr.bf16.gmra.mrb[0].mxu0 %v873
    %v918 = vpop.f32.mrb[0].mxu0
    %v919 = vadd.f32 %v814, %v918
    %v920 = vpop.f32.mrb[0].mxu0
    %v921 = vadd.f32 %v816, %v920
    %v922 = vpop.f32.mrb[0].mxu0
    %v923 = vadd.f32 %v818, %v922
    %v924 = vpop.f32.mrb[0].mxu0
    %v925 = vadd.f32 %v820, %v924
    %926 = vmatprep.mubr.bf16.mxu0 0
    %927 = vmatmul.mubr.bf16.gmra.mrb[0].mxu0 %v876
    %v928 = vpop.f32.mrb[0].mxu0
    %v929 = vadd.f32 %v824, %v928
    %v930 = vpop.f32.mrb[0].mxu0
    %v931 = vadd.f32 %v826, %v930
    %v932 = vpop.f32.mrb[0].mxu0
    %v933 = vadd.f32 %v828, %v932
    %v934 = vpop.f32.mrb[0].mxu0
    %v935 = vadd.f32 %v830, %v934
    %936 = vmatprep.mubr.bf16.mxu0 0
    %937 = vmatmul.mubr.bf16.gmra.mrb[0].mxu0 %v879
    %v938 = vpop.f32.mrb[0].mxu0
    %v939 = vadd.f32 %v834, %v938
    %v940 = vpop.f32.mrb[0].mxu0
    %v941 = vadd.f32 %v836, %v940
    %v942 = vpop.f32.mrb[0].mxu0
    %v943 = vadd.f32 %v838, %v942
    %v944 = vpop.f32.mrb[0].mxu0
    %v945 = vadd.f32 %v840, %v944
    %946 = vmatprep.mubr.bf16.mxu0 0
    %947 = vmatmul.mubr.bf16.gmra.mrb[0].mxu0 %v882
    %v948 = vpop.f32.mrb[0].mxu0
    %v949 = vadd.f32 %v844, %v948
    %v950 = vpop.f32.mrb[0].mxu0
    %v951 = vadd.f32 %v846, %v950
    %v952 = vpop.f32.mrb[0].mxu0
    %v953 = vadd.f32 %v848, %v952
    %v954 = vpop.f32.mrb[0].mxu0
    %v955 = vadd.f32 %v850, %v954
    %956 = vdwg.mxu0
    %v957 = vld [vmem:[%s7] sm:$0xff]
    %v958 = vld [vmem:[%s7 + $0x8] sm:$0xff]
    %v959 = vld [vmem:[%s7 + $0x10] sm:$0xff]
    %v960 = vld [vmem:[%s7 + $0x18] sm:$0xff]
    %v961 = vld [vmem:[%s7 + $0x20] sm:$0xff]
    %v962 = vld [vmem:[%s7 + $0x28] sm:$0xff]
    %v963 = vld [vmem:[%s7 + $0x30] sm:$0xff]
    %v964 = vld [vmem:[%s7 + $0x38] sm:$0xff]
    %966 = vset.pattern.permute.xlu0 0
    %967 = vperm.xlu0 %966, %v957
    %v968 = vpop.permute.xlu0 %967
    %971 = vset.pattern.permute.xlu0 0
    %972 = vperm.xlu0 %971, %v958
    %v973 = vpop.permute.xlu0 %972
    %976 = vset.pattern.permute.xlu0 0
    %977 = vperm.xlu0 %976, %v959
    %v978 = vpop.permute.xlu0 %977
    %981 = vset.pattern.permute.xlu0 0
    %982 = vperm.xlu0 %981, %v960
    %v983 = vpop.permute.xlu0 %982
    %986 = vset.pattern.permute.xlu0 0
    %987 = vperm.xlu0 %986, %v961
    %v988 = vpop.permute.xlu0 %987
    %991 = vset.pattern.permute.xlu0 0
    %992 = vperm.xlu0 %991, %v962
    %v993 = vpop.permute.xlu0 %992
    %996 = vset.pattern.permute.xlu0 0
    %997 = vperm.xlu0 %996, %v963
    %v998 = vpop.permute.xlu0 %997
    %1001 = vset.pattern.permute.xlu0 0
    %1002 = vperm.xlu0 %1001, %v964
    %v1003 = vpop.permute.xlu0 %1002
    %v1005 = vadd.f32 %v919, %v968
    %v1006 = vadd.f32 %v921, %v968
    %v1007 = vadd.f32 %v923, %v973
    %v1008 = vadd.f32 %v925, %v973
    %v1009 = vadd.f32 %v929, %v978
    %v1010 = vadd.f32 %v931, %v978
    %v1011 = vadd.f32 %v933, %v983
    %v1012 = vadd.f32 %v935, %v983
    %v1013 = vadd.f32 %v939, %v988
    %v1014 = vadd.f32 %v941, %v988
    %v1015 = vadd.f32 %v943, %v993
    %v1016 = vadd.f32 %v945, %v993
    %v1017 = vadd.f32 %v949, %v998
    %v1018 = vadd.f32 %v951, %v998
    %v1019 = vadd.f32 %v953, %v1003
    %v1020 = vadd.f32 %v955, %v1003
    %v1021 = vmax.f32 %v1005, 0.0
    %v1022 = vmax.f32 %v1006, 0.0
    %v1023 = vmax.f32 %v1007, 0.0
    %v1024 = vmax.f32 %v1008, 0.0
    %v1025 = vmax.f32 %v1009, 0.0
    %v1026 = vmax.f32 %v1010, 0.0
    %v1027 = vmax.f32 %v1011, 0.0
    %v1028 = vmax.f32 %v1012, 0.0
    %v1029 = vmax.f32 %v1013, 0.0
    %v1030 = vmax.f32 %v1014, 0.0
    %v1031 = vmax.f32 %v1015, 0.0
    %v1032 = vmax.f32 %v1016, 0.0
    %v1033 = vmax.f32 %v1017, 0.0
    %v1034 = vmax.f32 %v1018, 0.0
    %v1035 = vmax.f32 %v1019, 0.0
    %v1036 = vmax.f32 %v1020, 0.0
    %v1037 = vld [vmem:[%s8] sm:$0xff]
    %v1038 = vld [vmem:[%s8 + $0x8] sm:$0xff]
    %v1039 = vld [vmem:[%s8 + $0x10] sm:$0xff]
    %v1040 = vld [vmem:[%s8 + $0x18] sm:$0xff]
    %v1041 = vld [vmem:[%s8 + $0x20] sm:$0xff]
    %v1042 = vld [vmem:[%s8 + $0x28] sm:$0xff]
    %v1043 = vld [vmem:[%s8 + $0x30] sm:$0xff]
    %v1044 = vld [vmem:[%s8 + $0x38] sm:$0xff]
    %1046 = vset.pattern.permute.xlu0 0
    %1047 = vperm.xlu0 %1046, %v1037
    %v1048 = vpop.permute.xlu0 %1047
    %1051 = vset.pattern.permute.xlu0 0
    %1052 = vperm.xlu0 %1051, %v1038
    %v1053 = vpop.permute.xlu0 %1052
    %1056 = vset.pattern.permute.xlu0 0
    %1057 = vperm.xlu0 %1056, %v1039
    %v1058 = vpop.permute.xlu0 %1057
    %1061 = vset.pattern.permute.xlu0 0
    %1062 = vperm.xlu0 %1061, %v1040
    %v1063 = vpop.permute.xlu0 %1062
    %1066 = vset.pattern.permute.xlu0 0
    %1067 = vperm.xlu0 %1066, %v1041
    %v1068 = vpop.permute.xlu0 %1067
    %1071 = vset.pattern.permute.xlu0 0
    %1072 = vperm.xlu0 %1071, %v1042
    %v1073 = vpop.permute.xlu0 %1072
    %1076 = vset.pattern.permute.xlu0 0
    %1077 = vperm.xlu0 %1076, %v1043
    %v1078 = vpop.permute.xlu0 %1077
    %1081 = vset.pattern.permute.xlu0 0
    %1082 = vperm.xlu0 %1081, %v1044
    %v1083 = vpop.permute.xlu0 %1082
    %v1085 = vmul.f32 %v1021, %v1048
    %v1086 = vmul.f32 %v1022, %v1048
    %v1087 = vmul.f32 %v1023, %v1053
    %v1088 = vmul.f32 %v1024, %v1053
    %v1089 = vmul.f32 %v1025, %v1058
    %v1090 = vmul.f32 %v1026, %v1058
    %v1091 = vmul.f32 %v1027, %v1063
    %v1092 = vmul.f32 %v1028, %v1063
    %v1093 = vmul.f32 %v1029, %v1068
    %v1094 = vmul.f32 %v1030, %v1068
    %v1095 = vmul.f32 %v1031, %v1073
    %v1096 = vmul.f32 %v1032, %v1073
    %v1097 = vmul.f32 %v1033, %v1078
    %v1098 = vmul.f32 %v1034, %v1078
    %v1099 = vmul.f32 %v1035, %v1083
    %v1100 = vmul.f32 %v1036, %v1083
    %v1101 = vadd.f32 %v1085, %v1087
    %v1102 = vadd.f32 %v1101, %v1089
    %v1103 = vadd.f32 %v1102, %v1091
    %v1104 = vadd.f32 %v1103, %v1093
    %v1105 = vadd.f32 %v1104, %v1095
    %v1106 = vadd.f32 %v1105, %v1097
    %v1107 = vadd.f32 %v1106, %v1099
    %v1108 = vrot.slane %v1107, 4
    %v1109 = vadd.f32 %v1107, %v1108
    %v1110 = vrot.slane %v1109, 2
    %v1111 = vadd.f32 %v1109, %v1110
    %v1112 = vrot.slane %v1111, 1
    %v1113 = vadd.f32 %v1111, %v1112
    %v1114 = vadd.f32 %v1086, %v1088
    %v1115 = vadd.f32 %v1114, %v1090
    %v1116 = vadd.f32 %v1115, %v1092
    %v1117 = vadd.f32 %v1116, %v1094
    %v1118 = vadd.f32 %v1117, %v1096
    %v1119 = vadd.f32 %v1118, %v1098
    %v1120 = vadd.f32 %v1119, %v1100
    %v1121 = vrot.slane %v1120, 4
    %v1122 = vadd.f32 %v1120, %v1121
    %v1123 = vrot.slane %v1122, 2
    %v1124 = vadd.f32 %v1122, %v1123
    %v1125 = vrot.slane %v1124, 1
    %v1126 = vadd.f32 %v1124, %v1125
    %s1127 = sld [smem:[#allocation2]]
    %v1128 = vstv %s1127
    %v1129 = vadd.f32 %v1113, %v1128
    %v1130 = vadd.f32 %v1126, %v1128
    %v1133 = vcombine.low %v1129, %v1130
    %v1135 = vunpack.c.l.s4 1966171168
    %v1136 = vunpack.c.0.s8 %v1135
    %v1137 = vlaneseq
    %v1138 = vshrl.u32 %v1137, 7
    %v1139 = vsub.s32 %v1136, %v1138
    %v1140 = vrot.slane %v1133, %v1139
    %v1142 = vunpack.c.l.s4 1966171168
    %v1143 = vunpack.c.0.s8 %v1142
    %v1144 = vlaneseq
    %v1145 = vshrl.u32 %v1144, 7
    %v1146 = vsub.s32 %v1143, %v1145
    %v1147 = vrot.slane %v1140, %v1146
    %v1149 = vlaneseq
    %vm1150 = vcmp.ge.s32.totalorder %v1149, 0
    %vm1151 = vcmp.lt.s32.totalorder %v1149, 256
    %vm1152 = vmand %vm1150, %vm1151
    %1153 = vst.msk [vmem:[#allocation3] sm:$0x3] %vm1152, %v1147
    // Predicated region
    $region42: #{tpu_custom_call.1} parent=1 // pred_check
      _
    $region43: #{tpu_custom_call.1} parent=1 // pred_check_branch
      %1155 = sbr.rel (0) target = $region45
    $region44: #{tpu_custom_call.1} parent=1 // pred_region
      %s1157 = ssub.s32 32, 32
      %1158 = vsyncadd [#allocation4], %s1157
      %s1160 = sshll.u32 [#allocation3], 4
      %s1161 = int_to_ptr.vmem [resolvable:$true] %s1160
      %1163 = dma.vmem_to_hbm [thread:$0]  %s1161, 32, %s10, [#allocation4]
    $region45: #{tpu_custom_call.1} parent=1 // pred_fallthru
      _
    // Predicated region
    $region46: #{tpu_custom_call.1} parent=1 // pred_check
      _
    $region47: #{tpu_custom_call.1} parent=1 // pred_check_branch
      %1165 = sbr.rel (0) target = $region49
    $region48: #{tpu_custom_call.1} parent=1 // pred_region
      %1166 = dma.done [#allocation4], 32
    $region49: #{tpu_custom_call.1} parent=1 // pred_fallthru
      _
    %1167 = vsyncpa [#allocation4], 1

</llo_original>
